<compile_context>
chip_gen: v7x
topology: tpu7x:2x2x1
jax: 0.10.0
libtpu: 0.0.40
codegen_flags: <defaults>
</compile_context>

<pallas_src>
import math

import jax
import jax.numpy as jnp
from jax.experimental import pallas as pl
from jax.experimental.pallas import tpu as pltpu


def _copy_kernel(x_ref, o_ref):
    # Identity copy of the current (block_rows, lane) VMEM tile.
    # This is the spot where fused elementwise compute would go.
    o_ref[...] = x_ref[...]


def _dma_copy_kernel(x_hbm_ref, o_hbm_ref, sem):
    # Whole-array HBM->HBM copy on the DMA engine; no VMEM / vreg roundtrip.
    pltpu.make_async_copy(x_hbm_ref, o_hbm_ref, sem).start()
    pltpu.make_async_copy(x_hbm_ref, o_hbm_ref, sem).wait()


def _sublane_multiple(dtype):
    # Sub-32-bit dtypes pack along sublanes: f32 -> 8, bf16 -> 16, int8 -> 32.
    itemsize = jnp.dtype(dtype).itemsize
    return {4: 8, 2: 16, 1: 32}.get(itemsize, 8)


def _vmem_budget():
    """Return (per-block byte cap, vmem_limit_bytes, min grid steps)."""
    mib = 1024 * 1024
    phys = None
    try:
        info = pltpu.get_tpu_info()
        phys = int(getattr(info, "vmem_capacity_bytes", 0)) or None
    except Exception:
        phys = None
    if phys is None:
        # Unknown generation: conservative defaults, safe everywhere.
        return 4 * mib, 32 * mib, 1
    if phys >= 128 * mib:
        # v5e / v6e: 128 MiB physical VMEM. 8 MiB blocks; 2 in-bufs + 2
        # out-bufs = 32 MiB, inside the raised 48 MiB scoped limit.
        return 8 * mib, 48 * mib, 1
    # v7x: 64 MiB physical / 32 MiB scoped default. 6 MiB blocks -> 24 MiB of
    # pipeline buffers; 2 TensorCores -> prefer >= 2 grid steps.
    return 6 * mib, 32 * mib, 2


def _choose_tiling(total_elems, dtype, block_byte_cap, min_steps):
    """Pick (rows, lane, block_rows) for a lane-dense flat slab, or None."""
    itemsize = jnp.dtype(dtype).itemsize
    sub_mult = _sublane_multiple(dtype)
    for lane in (8192, 4096, 2048, 1024, 512, 256, 128):
        if total_elems % lane:
            continue
        rows = total_elems // lane
        # (8, 128) BlockSpec legality only needs row blocks that are a
        # multiple of 8 (the full-extent fallback handles everything else).
        if rows % 8:
            continue
        cap_rows = max(8, block_byte_cap // (lane * itemsize))
        if min_steps > 1:
            # Keep at least `min_steps` grid steps (never below 8 rows) so the
            # parallel grid can shard across both v7x TensorCores.
            cap_rows = min(cap_rows, max(8, rows // min_steps))
        limit = min(rows, cap_rows)
        best = None          # largest multiple-of-8 divisor of rows <= limit
        best_packed = None   # ... that is also packing-granularity aligned
        for d in range(8, limit + 1, 8):
            if rows % d == 0:
                best = d
                if d % sub_mult == 0:
                    best_packed = d
        if best is None:
            continue
        # Prefer a packing-aligned block unless it is much smaller than the
        # largest legal block (block size dominates for a mem-bound copy).
        if best_packed is not None and 2 * best_packed >= best:
            block_rows = best_packed
        else:
            block_rows = best
        return rows, lane, block_rows
    return None


def reshape_copy_pallas(x_flat, copy_mode="vmem"):
    """Identity copy of a flat 1-D array through a Pallas kernel.

    copy_mode="vmem": lane-dense tiled VMEM copy (scaffold for fusing compute).
    copy_mode="dma" : single HBM->HBM DMA; no TensorCore / VMEM on the path.
    """
    total = int(x_flat.size)
    dtype = x_flat.dtype
    itemsize = jnp.dtype(dtype).itemsize
    nbytes = total * itemsize
    block_cap, vmem_limit, min_steps = _vmem_budget()
    cost = pl.CostEstimate(flops=0, transcendentals=0, bytes_accessed=2 * nbytes)

    if copy_mode == "dma":
        return pl.pallas_call(
            _dma_copy_kernel,
            out_shape=jax.ShapeDtypeStruct((total,), dtype),
            in_specs=[pl.BlockSpec(memory_space=pl.ANY)],
            out_specs=pl.BlockSpec(memory_space=pl.ANY),
            scratch_shapes=[pltpu.SemaphoreType.DMA],
            cost_estimate=cost,
        )(x_flat)

    tiling = _choose_tiling(total, dtype, block_cap, min_steps)
    if tiling is None:
        # No (8k, 128m)-aligned slab exists. Copy the whole array as a single
        # full-extent block if its pipeline buffers fit the VMEM budget;
        # otherwise the reshape stays metadata-only (still correct).
        if 4 * nbytes + (1 << 20) <= vmem_limit:
            out = pl.pallas_call(
                _copy_kernel,
                out_shape=jax.ShapeDtypeStruct((1, total), dtype),
                in_specs=[pl.BlockSpec(memory_space=pltpu.MemorySpace.VMEM)],
                out_specs=pl.BlockSpec(memory_space=pltpu.MemorySpace.VMEM),
                input_output_aliases={0: 0},
                compiler_params=pltpu.CompilerParams(vmem_limit_bytes=vmem_limit),
                cost_estimate=cost,
            )(x_flat.reshape(1, total))
            return out.reshape(total)
        # TODO(synk): chunked pl.cdiv grid with a padded last block for huge
        # unaligned arrays; metadata-only reshape is still semantically exact.
        return x_flat

    rows, lane, block_rows = tiling
    slab = x_flat.reshape(rows, lane)
    out = pl.pallas_call(
        _copy_kernel,
        out_shape=jax.ShapeDtypeStruct((rows, lane), dtype),
        grid_spec=pltpu.PrefetchScalarGridSpec(
            num_scalar_prefetch=0,
            grid=(rows // block_rows,),
            in_specs=[pl.BlockSpec((block_rows, lane), lambda i: (i, 0))],
            out_specs=pl.BlockSpec((block_rows, lane), lambda i: (i, 0)),
        ),
        compiler_params=pltpu.CompilerParams(
            dimension_semantics=("parallel",),
            vmem_limit_bytes=vmem_limit,
        ),
        # Alias the (flattened) input into the output. This only saves an HBM
        # buffer if the caller no longer uses the input; otherwise XLA inserts
        # a defensive copy (numerics unaffected either way).
        input_output_aliases={0: 0},
        cost_estimate=cost,
    )(slab)
    return out.reshape(total)


def reshape_forward(x, shape, force_pallas_copy=False, copy_mode="vmem"):
    """Equivalent of Reshape(shape).forward(x): x.reshape([x.shape[0]] + shape).

    Default path is metadata-only (zero-cost; row-major element order is
    unchanged). Set force_pallas_copy=True to route the data through a Pallas
    identity-copy kernel (copy_mode="vmem" fusion scaffold, or "dma").
    """
    b = x.shape[0]
    n_in = math.prod(x.shape[1:])
    n_out = math.prod(shape)
    assert n_in == n_out, f"cannot reshape {x.shape[1:]} -> {shape}"

    if not force_pallas_copy:
        return x.reshape([b] + list(shape))

    flat = reshape_copy_pallas(x.reshape(b * n_in), copy_mode=copy_mode)
    return flat.reshape([b] + list(shape))


if __name__ == "__main__":
    key = jax.random.PRNGKey(0)

    # NCHW input: batch=2, channels=4, spatial=16x16 -> reshape to [8, 128].
    x = jax.random.normal(key, (2, 4, 16, 16), dtype=jnp.float32)
    target = [8, 128]
    ref = x.reshape([x.shape[0]] + target)

    # Default (recommended) path: metadata-only, no kernel, no HBM traffic.
    out_fast = jax.block_until_ready(reshape_forward(x, target))

    # Pallas lane-dense tiled VMEM copy (fusion scaffold).
    out_vmem = jax.block_until_ready(
        reshape_forward(x, target, force_pallas_copy=True, copy_mode="vmem"))

    # Pallas DMA-only HBM->HBM copy.
    out_dma = jax.block_until_ready(
        reshape_forward(x, target, force_pallas_copy=True, copy_mode="dma"))

    assert out_vmem.shape == (2, 8, 128), out_vmem.shape
    assert out_vmem.dtype == x.dtype
    assert bool(jnp.array_equal(out_fast, ref))
    assert bool(jnp.array_equal(out_vmem, ref))
    assert bool(jnp.array_equal(out_dma, ref))

    # bf16 case: exercises the dtype-aware sublane-packing block choice.
    xb = jax.random.normal(key, (2, 8, 64, 128), dtype=jnp.bfloat16)
    refb = xb.reshape([2, 64, 1024])
    outb = jax.block_until_ready(
        reshape_forward(xb, [64, 1024], force_pallas_copy=True))
    assert bool(jnp.array_equal(outb, refb))

    # Element count not a multiple of 128: exercises the full-extent fallback.
    xo = jax.random.normal(key, (2, 3, 5, 7), dtype=jnp.float32)
    refo = xo.reshape([2, 105])
    outo = jax.block_until_ready(
        reshape_forward(xo, [105], force_pallas_copy=True))
    assert bool(jnp.array_equal(outo, refo))

    print("KERNEL_OK")
</pallas_src>

<mosaic_0001>
module attributes {stable_mosaic.version = 11 : i64} {
  func.func @_copy_kernel(%arg0: i32, %arg1: memref<8x256xf32, #tpu.memory_space<vmem>>, %arg2: memref<8x256xf32, #tpu.memory_space<vmem>>) attributes {dimension_semantics = [#tpu.dimension_semantics<parallel>], iteration_bounds = array<i64: 1>, scalar_prefetch = 0 : i64, scratch_operands = 0 : i64, tpu.core_type = #tpu.core_type<tc>, window_params = [{transform_indices = @transform_0, window_bounds = array<i64: 8, 256>}, {transform_indices = @transform_1, window_bounds = array<i64: 8, 256>}]} {
    %c0 = arith.constant 0 : index
    %c0_0 = arith.constant 0 : index
    %0 = vector.load %arg1[%c0, %c0_0] : memref<8x256xf32, #tpu.memory_space<vmem>>, vector<8x256xf32>
    %c0_1 = arith.constant 0 : index
    %c0_2 = arith.constant 0 : index
    %1 = vector.load %arg2[%c0_1, %c0_2] : memref<8x256xf32, #tpu.memory_space<vmem>>, vector<8x256xf32>
    tpu.vector_store %arg2[%c0_1, %c0_2], %0 {strides = array<i32>} : memref<8x256xf32, #tpu.memory_space<vmem>>, vector<8x256xf32>,
    return
  }
  func.func @transform_0(%arg0: i32) -> (i32, i32) {
    %c0_i32 = arith.constant 0 : i32
    %c0_i32_0 = arith.constant 0 : i32
    return %arg0, %c0_i32 : i32, i32
  }
  func.func @transform_1(%arg0: i32) -> (i32, i32) {
    %c0_i32 = arith.constant 0 : i32
    %c0_i32_0 = arith.constant 0 : i32
    return %arg0, %c0_i32 : i32, i32
  }
}

</mosaic_0001>

<llo_original>
// kernel: tpu_custom_call.1
$region0: #{tpu_custom_call.1}
  #allocation0 [shape = 'u32[]', space=smem, size = 0x4, offset = 0x4, fixed_abs, tag = 'smem constant byte address 0x4 - core index']
  #allocation1 [shape = 'u32[144,128]{1,0:T(1,128)}', space=vmem, size = 0x12000, scoped, tag = 'internal scratch']
  %s0 = inlined_call_operand.hbm [shape: f32[8,256], index: 0, kind: input, shape index: {}, may-alias: {0,1}]
  %s1 = inlined_call_operand.hbm [shape: f32[8,256], index: 1, kind: output, shape index: {}, may-alias: {0,1}]
  %s2 = sld [smem:[#allocation0]]
  $region18: #{tpu_custom_call.1} parent=0
    _
  %s4 = ssub.s32 1, %s2
  %s5 = scalar_select 0, %s4, %s2
  $region1: #{tpu_custom_call.1} parent=0
    #allocation2 [shape = 'u8[8192]{0}', space=vmem, size = 0x2000, scoped, tag = 'input window, operand 0, single buffered']
    #allocation3 [shape = 's32[1]{0}', space=sflag, size = 0x4, scoped, tag = 'scoped memory for tpu_custom_call.1']
    #allocation4 [shape = 's32[1]{0}', space=sflag, size = 0x4, scoped, tag = 'scoped memory for tpu_custom_call.1']
    #allocation5 [shape = 'u8[8192]{0}', space=vmem, size = 0x2000, scoped, tag = 'output window, operand 0, single buffered']
    %6 = vsyncpa [#allocation3], 0
    %7 = vsyncpa [#allocation4], 0
    // Predicated region
    $region2: #{tpu_custom_call.1} parent=1 // pred_check
      _
    $region3: #{tpu_custom_call.1} parent=1 // pred_check_branch
      %9 = sbr.rel (0) target = $region5
    $region4: #{tpu_custom_call.1} parent=1 // pred_region
      %s11 = ssub.s32 256, 256
      %12 = vsyncadd [#allocation3], %s11
      %s14 = sshll.u32 [#allocation2], 4
      %s15 = int_to_ptr.vmem [resolvable:$true] %s14
      %17 = dma.hbm_to_vmem [thread:$0]  %s0, 256, %s15, [#allocation3]
    $region5: #{tpu_custom_call.1} parent=1 // pred_fallthru
      _
    // Predicated region
    $region6: #{tpu_custom_call.1} parent=1 // pred_check
      _
    $region7: #{tpu_custom_call.1} parent=1 // pred_check_branch
      %19 = sbr.rel (0) target = $region9
    $region8: #{tpu_custom_call.1} parent=1 // pred_region
      %20 = dma.done [#allocation3], 256
    $region9: #{tpu_custom_call.1} parent=1 // pred_fallthru
      _
    %v21 = vld [vmem:[#allocation2] sm:$0xff]
    %v22 = vld [vmem:[#allocation2 + $0x8] sm:$0xff]
    %23 = vst [vmem:[#allocation5] sm:$0xff] %v21
    %24 = vst [vmem:[#allocation5 + $0x8] sm:$0xff] %v22
    // Predicated region
    $region10: #{tpu_custom_call.1} parent=1 // pred_check
      _
    $region11: #{tpu_custom_call.1} parent=1 // pred_check_branch
      %26 = sbr.rel (0) target = $region13
    $region12: #{tpu_custom_call.1} parent=1 // pred_region
      %s28 = ssub.s32 256, 256
      %29 = vsyncadd [#allocation4], %s28
      %s31 = sshll.u32 [#allocation5], 4
      %s32 = int_to_ptr.vmem [resolvable:$true] %s31
      %34 = dma.vmem_to_hbm [thread:$0]  %s32, 256, %s1, [#allocation4]
    $region13: #{tpu_custom_call.1} parent=1 // pred_fallthru
      _
    // Predicated region
    $region14: #{tpu_custom_call.1} parent=1 // pred_check
      _
    $region15: #{tpu_custom_call.1} parent=1 // pred_check_branch
      %36 = sbr.rel (0) target = $region17
    $region16: #{tpu_custom_call.1} parent=1 // pred_region
      %37 = dma.done [#allocation4], 256
    $region17: #{tpu_custom_call.1} parent=1 // pred_fallthru
      _
    %38 = vsyncpa [#allocation3], 1
    %39 = vsyncpa [#allocation4], 1

</llo_original>
